<compile_context>
chip_gen: v6e
topology: v6e:2x2x1
jax: 0.10.0
libtpu: 0.0.40
codegen_flags: <defaults>
</compile_context>

<pallas_src>
import functools

import jax
import jax.numpy as jnp
from jax import lax
from jax.experimental import pallas as pl
from jax.experimental.pallas import tpu as pltpu

BN_EPS = 1e-5  # nn.BatchNorm1d default


def _fc_kernel(*refs, with_bn, inv_n, single_k):
    if with_bn:
        x_ref, w_ref, g_ref, beta_ref, o_ref, *scratch = refs
    else:
        x_ref, w_ref, b_ref, o_ref, *scratch = refs

    def epilogue(y):
        # y: (N, TN) f32 (full batch resident, exact per-feature batch stats).
        if with_bn:
            # Training-mode BatchNorm1d, single pass over y:
            # biased batch stats, var = E[y^2] - mean^2 (clamped at 0 to guard
            # against tiny negative values from cancellation).
            mean = jnp.sum(y, axis=0, keepdims=True) * inv_n
            ex2 = jnp.sum(y * y, axis=0, keepdims=True) * inv_n
            var = jnp.maximum(ex2 - mean * mean, 0.0)
            scale = lax.rsqrt(var + BN_EPS) * g_ref[...]      # (1, TN); EUP rsqrt
            shift = beta_ref[...] - mean * scale
            y = y * scale + shift
        else:
            y = y + b_ref[...]
        o_ref[...] = jnp.maximum(y, 0.0).astype(o_ref.dtype)

    # bf16 MXU operands, f32 accumulation.  astype is a no-op if the wrapper
    # already shipped bf16 x; otherwise the cast happens here (VPU filler).
    x_bf = x_ref[...].astype(jnp.bfloat16)

    if single_k:
        # tk == Din: no accumulator needed at all.
        epilogue(jnp.dot(x_bf, w_ref[...], preferred_element_type=jnp.float32))
    else:
        acc_ref, = scratch
        k = pl.program_id(1)

        @pl.when(k == 0)
        def _():
            acc_ref[...] = jnp.zeros_like(acc_ref)

        acc_ref[...] += jnp.dot(x_bf, w_ref[...],
                                preferred_element_type=jnp.float32)

        @pl.when(k == pl.num_programs(1) - 1)
        def _():
            epilogue(acc_ref[...])


def _tpu_info():
    """(vmem_capacity_bytes, tensorcores_per_device, mxu_width) with safe fallbacks."""
    kind = ""
    try:
        kind = jax.devices()[0].device_kind.lower()
    except Exception:
        pass
    if "v5" in kind and ("lite" in kind or "5e" in kind):
        cores, mxu, default_vmem = 1, 128, 128 * 2 ** 20      # v5e
    elif "v6" in kind:
        cores, mxu, default_vmem = 1, 256, 128 * 2 ** 20      # v6e
    elif "v7" in kind or "7x" in kind:
        cores, mxu, default_vmem = 2, 256, 64 * 2 ** 20       # v7x (per TC)
    else:
        cores, mxu, default_vmem = 2, 256, 64 * 2 ** 20       # conservative
    vmem = default_vmem
    try:
        vmem = int(pltpu.get_tpu_info().vmem_capacity_bytes)
    except Exception:
        pass
    return vmem, cores, mxu


def _feat_tile_candidates(d_out, cores, mxu):
    if d_out % 128 != 0:
        # Full-width block (legal: block == full dim) -> masked stores, but correct.
        # TODO(synk): pad Dout to a multiple of 128 for lane-dense stores.
        return [d_out]
    sizes = [c for c in ((512, 256, 128) if mxu >= 256 else (256, 128))
             if d_out % c == 0]
    if cores >= 2:
        # Prefer an even feature-step count so both TensorCores get equal work
        # under dimension_semantics=("parallel", ...).
        even = [c for c in sizes if (d_out // c) >= 2 and (d_out // c) % 2 == 0]
        rest = [c for c in sizes if c not in even]
        return even + rest
    return sizes


def _k_tile_candidates(d_in):
    # Largest first: tk == Din means x is DMA'd exactly once and there is no
    # accumulator read-modify-write; smaller tiles only as a VMEM fallback.
    cands = [d_in]
    for c in (2048, 1024, 512, 256, 128):
        if c < d_in and d_in % c == 0:
            cands.append(c)
    return cands


def _vmem_footprint(n, tk, tn, d_in, x_is_bf16, out_bytes, n_vec):
    """Rough double-buffered VMEM bytes for one grid step (plus accumulator)."""
    single_k = (tk == d_in)
    n_pad = -(-n // 16) * 16                              # bf16 sublane packing
    x_bytes = 2 if (x_is_bf16 or not single_k) else 4     # f32 x only when tk == Din
    xb = 2 * n_pad * tk * x_bytes
    wb = 2 * tk * tn * 2
    vb = n_vec * 2 * 8 * max(tn, 128) * 4                 # (1, tn) pads to 8 sublanes
    ob = 2 * n_pad * tn * out_bytes
    ab = 0 if single_k else n_pad * tn * 4
    return xb + wb + vb + ob + ab


def fully_connected_forward(x, weight, bias, gamma=None, beta=None, *,
                            with_bn=True, feat_tile=None, k_tile=None,
                            out_dtype=None):
    """x: (N, Din). weight: (Dout, Din) (PyTorch layout). Returns (N, Dout).

    Training-mode BatchNorm1d semantics when with_bn=True (biased batch
    statistics over the batch axis; the Linear bias cancels and is skipped).
    """
    n, d_in = x.shape
    d_out, d_in_w = weight.shape
    assert d_in == d_in_w
    out_dtype = x.dtype if out_dtype is None else out_dtype
    out_bytes = jnp.dtype(out_dtype).itemsize
    n_vec = 2 if with_bn else 1
    x_is_bf16 = (x.dtype == jnp.bfloat16)

    vmem_capacity, cores, mxu = _tpu_info()
    budget = int(0.70 * vmem_capacity)

    if feat_tile is not None and k_tile is not None:
        tn, tk = feat_tile, k_tile
        assert d_out % tn == 0 and d_in % tk == 0
    else:
        tn = tk = None
        # tk is the higher-value lever (x read once, no accumulator RMW), so
        # shrink tn before shrinking tk.
        for tk_c in _k_tile_candidates(d_in):
            for tn_c in _feat_tile_candidates(d_out, cores, mxu):
                if _vmem_footprint(n, tk_c, tn_c, d_in, x_is_bf16,
                                   out_bytes, n_vec) <= budget:
                    tn, tk = tn_c, tk_c
                    break
            if tn is not None:
                break
        if tn is None:
            # TODO(synk): two-pass batch-tiled BN (sum/sumsq pass + normalize
            # pass) for batches too large for whole-batch VMEM residency.
            raise ValueError(
                f"batch N={n} too large for whole-batch-resident BN on this "
                f"TPU generation (VMEM budget {budget} bytes)")

    single_k = (tk == d_in)

    # x operand: bf16 as-is; f32 DMA'd once + in-kernel cast when tk == Din
    # (avoids a standalone f32->bf16 HBM pass); wrapper-cast otherwise so the
    # per-feature-tile re-reads are not re-cast each time.
    if x_is_bf16 or single_k:
        x_in = x
    else:
        x_in = x.astype(jnp.bfloat16)

    # Transpose fused with the bf16 cast (single HBM pass) so the kernel sees
    # the canonical (M,K)x(K,N) MXU layout.  In a real model this conversion
    # would be done once at parameter-load time.
    w_bf = weight.T.astype(jnp.bfloat16)                   # (Din, Dout)

    x_spec = pl.BlockSpec((n, tk), lambda j, k: (0, k))
    w_spec = pl.BlockSpec((tk, tn), lambda j, k: (k, j))
    vec_spec = pl.BlockSpec((1, tn), lambda j, k: (0, j))
    out_spec = pl.BlockSpec((n, tn), lambda j, k: (0, j))

    if with_bn:
        # Linear bias dropped: a per-feature constant cancels exactly under
        # training-mode BN.  (Eval-mode BN would need the bias.)
        inputs = (x_in, w_bf,
                  gamma.reshape(1, d_out).astype(jnp.float32),
                  beta.reshape(1, d_out).astype(jnp.float32))
        in_specs = [x_spec, w_spec, vec_spec, vec_spec]
    else:
        inputs = (x_in, w_bf, bias.reshape(1, d_out).astype(jnp.float32))
        in_specs = [x_spec, w_spec, vec_spec]

    footprint = _vmem_footprint(n, tk, tn, d_in, x_is_bf16, out_bytes, n_vec)
    vmem_limit = max(int(1.35 * footprint), 16 * 2 ** 20)
    vmem_limit = min(vmem_limit, int(0.9 * vmem_capacity))
    vmem_limit = max(vmem_limit, footprint)   # never clamp below the footprint

    kernel = functools.partial(_fc_kernel, with_bn=with_bn,
                               inv_n=1.0 / n, single_k=single_k)
    scratch_shapes = [] if single_k else [pltpu.VMEM((n, tn), jnp.float32)]

    return pl.pallas_call(
        kernel,
        out_shape=jax.ShapeDtypeStruct((n, d_out), out_dtype),
        grid_spec=pltpu.PrefetchScalarGridSpec(
            num_scalar_prefetch=0,
            grid=(d_out // tn, d_in // tk),   # feature axis outer, K innermost
            in_specs=in_specs,
            out_specs=out_spec,
            scratch_shapes=scratch_shapes,
        ),
        compiler_params=pltpu.CompilerParams(
            dimension_semantics=("parallel", "arbitrary"),
            vmem_limit_bytes=vmem_limit),
    )(*inputs)


def reference_forward(x, weight, bias, gamma, beta, with_bn=True):
    y = x @ weight.T + bias
    if with_bn:
        mean = jnp.mean(y, axis=0, keepdims=True)
        var = jnp.mean((y - mean) ** 2, axis=0, keepdims=True)
        y = (y - mean) / jnp.sqrt(var + BN_EPS) * gamma + beta
    return jnp.maximum(y, 0.0)


if __name__ == "__main__":
    key = jax.random.PRNGKey(0)
    k_x, k_w, k_b, k_g, k_be = jax.random.split(key, 5)

    # Small shapes consistent with the module; N multiple of 16 for bf16
    # sublane packing.
    N, INP_DIM, OUT_DIM = 16, 256, 256

    x = jax.random.normal(k_x, (N, INP_DIM), dtype=jnp.float32)
    bound = float(INP_DIM) ** -0.5
    weight = jax.random.uniform(k_w, (OUT_DIM, INP_DIM), jnp.float32, -bound, bound)
    bias = jax.random.uniform(k_b, (OUT_DIM,), jnp.float32, -bound, bound)
    gamma = 1.0 + 0.1 * jax.random.normal(k_g, (OUT_DIM,), jnp.float32)
    beta = 0.1 * jax.random.normal(k_be, (OUT_DIM,), jnp.float32)

    ref_bn = reference_forward(x, weight, bias, gamma, beta, with_bn=True)
    ref_nobn = reference_forward(x, weight, bias, gamma, beta, with_bn=False)

    # 1) with_bn=True, auto tiles -> tk == Din (single-K, no accumulator, x f32
    #    DMA'd once + in-kernel bf16 cast).
    out = jax.block_until_ready(
        fully_connected_forward(x, weight, bias, gamma, beta, with_bn=True))
    assert out.shape == (N, OUT_DIM)
    err = jnp.max(jnp.abs(out - ref_bn))
    assert jnp.allclose(out, ref_bn, atol=5e-2, rtol=5e-2), f"max err = {err}"

    # 2) with_bn=True, explicit small tiles -> grid (2, 2), exercises the
    #    multi-K accumulator path (pl.when init/finalize) + wrapper bf16 cast.
    out2 = jax.block_until_ready(
        fully_connected_forward(x, weight, bias, gamma, beta,
                                with_bn=True, feat_tile=128, k_tile=128))
    err2 = jnp.max(jnp.abs(out2 - ref_bn))
    assert jnp.allclose(out2, ref_bn, atol=5e-2, rtol=5e-2), f"max err = {err2}"

    # 3) with_bn=False, auto tiles (Linear bias + ReLU only).
    out3 = jax.block_until_ready(
        fully_connected_forward(x, weight, bias, gamma, beta, with_bn=False))
    err3 = jnp.max(jnp.abs(out3 - ref_nobn))
    assert jnp.allclose(out3, ref_nobn, atol=5e-2, rtol=5e-2), f"max err = {err3}"

    # 4) bf16 output option (halves output HBM write); loosened tolerance for
    #    the extra bf16 output quantization.
    out4 = jax.block_until_ready(
        fully_connected_forward(x, weight, bias, gamma, beta,
                                with_bn=True, out_dtype=jnp.bfloat16))
    assert out4.dtype == jnp.bfloat16
    err4 = jnp.max(jnp.abs(out4.astype(jnp.float32) - ref_bn))
    assert jnp.allclose(out4.astype(jnp.float32), ref_bn,
                        atol=1e-1, rtol=1e-1), f"max err = {err4}"

    print("KERNEL_OK")
</pallas_src>

<mosaic_0001>
module attributes {stable_mosaic.version = 11 : i64} {
  func.func @_fc_kernel(%arg0: i32, %arg1: i32, %arg2: memref<16x256xf32, #tpu.memory_space<vmem>>, %arg3: memref<256x128xbf16, #tpu.memory_space<vmem>>, %arg4: memref<1x128xf32, #tpu.memory_space<vmem>>, %arg5: memref<1x128xf32, #tpu.memory_space<vmem>>, %arg6: memref<16x128xf32, #tpu.memory_space<vmem>>) attributes {dimension_semantics = [#tpu.dimension_semantics<parallel>, #tpu.dimension_semantics<arbitrary>], iteration_bounds = array<i64: 2, 1>, scalar_prefetch = 0 : i64, scratch_operands = 0 : i64, tpu.core_type = #tpu.core_type<tc>, window_params = [{transform_indices = @transform_0, window_bounds = array<i64: 16, 256>}, {transform_indices = @transform_1, window_bounds = array<i64: 256, 128>}, {transform_indices = @transform_2, window_bounds = array<i64: 1, 128>}, {transform_indices = @transform_3, window_bounds = array<i64: 1, 128>}, {transform_indices = @transform_4, window_bounds = array<i64: 16, 128>}]} {
    %c0 = arith.constant 0 : index
    %c0_0 = arith.constant 0 : index
    %0 = vector.load %arg2[%c0, %c0_0] : memref<16x256xf32, #tpu.memory_space<vmem>>, vector<16x256xf32>
    %1 = arith.truncf %0 : vector<16x256xf32> to vector<16x256xbf16>
    %c0_1 = arith.constant 0 : index
    %c0_2 = arith.constant 0 : index
    %2 = vector.load %arg3[%c0_1, %c0_2] : memref<256x128xbf16, #tpu.memory_space<vmem>>, vector<256x128xbf16>
    %cst = arith.constant dense<0.000000e+00> : vector<16x128xf32>
    %3 = tpu.matmul %1, %2, %cst {dimension_numbers = #tpu.dot_dimension_numbers<[1], [0], [0], [1], [0, 0, 1, 1], [], []>} : vector<16x256xbf16>, vector<256x128xbf16>, vector<16x128xf32> -> vector<16x128xf32>
    %cst_3 = arith.constant dense<0.000000e+00> : vector<128xf32>
    %4 = vector.multi_reduction <add>, %3, %cst_3 [0] : vector<16x128xf32> to vector<128xf32>
    %5 = vector.shape_cast %4 : vector<128xf32> to vector<1x128xf32>
    %cst_4 = arith.constant 6.250000e-02 : f32
    %6 = vector.broadcast %cst_4 : f32 to vector<1x128xf32>
    %7 = arith.mulf %5, %6 : vector<1x128xf32>
    %8 = arith.mulf %3, %3 : vector<16x128xf32>
    %cst_5 = arith.constant dense<0.000000e+00> : vector<128xf32>
    %9 = vector.multi_reduction <add>, %8, %cst_5 [0] : vector<16x128xf32> to vector<128xf32>
    %10 = vector.shape_cast %9 : vector<128xf32> to vector<1x128xf32>
    %cst_6 = arith.constant 6.250000e-02 : f32
    %11 = vector.broadcast %cst_6 : f32 to vector<1x128xf32>
    %12 = arith.mulf %10, %11 : vector<1x128xf32>
    %13 = arith.mulf %7, %7 : vector<1x128xf32>
    %14 = arith.subf %12, %13 : vector<1x128xf32>
    %cst_7 = arith.constant 0.000000e+00 : f32
    %15 = vector.broadcast %cst_7 : f32 to vector<1x128xf32>
    %16 = arith.maximumf %14, %15 : vector<1x128xf32>
    %cst_8 = arith.constant 9.99999974E-6 : f32
    %17 = vector.broadcast %cst_8 : f32 to vector<1x128xf32>
    %18 = arith.addf %16, %17 : vector<1x128xf32>
    %19 = math.rsqrt %18 : vector<1x128xf32>
    %c0_9 = arith.constant 0 : index
    %c0_10 = arith.constant 0 : index
    %20 = vector.load %arg4[%c0_9, %c0_10] : memref<1x128xf32, #tpu.memory_space<vmem>>, vector<1x128xf32>
    %21 = arith.mulf %19, %20 : vector<1x128xf32>
    %c0_11 = arith.constant 0 : index
    %c0_12 = arith.constant 0 : index
    %22 = vector.load %arg5[%c0_11, %c0_12] : memref<1x128xf32, #tpu.memory_space<vmem>>, vector<1x128xf32>
    %23 = arith.mulf %7, %21 : vector<1x128xf32>
    %24 = arith.subf %22, %23 : vector<1x128xf32>
    %25 = vector.broadcast %21 : vector<1x128xf32> to vector<16x128xf32>
    %26 = arith.mulf %3, %25 : vector<16x128xf32>
    %27 = vector.broadcast %24 : vector<1x128xf32> to vector<16x128xf32>
    %28 = arith.addf %26, %27 : vector<16x128xf32>
    %cst_13 = arith.constant 0.000000e+00 : f32
    %29 = vector.broadcast %cst_13 : f32 to vector<16x128xf32>
    %30 = arith.maximumf %28, %29 : vector<16x128xf32>
    %c0_14 = arith.constant 0 : index
    %c0_15 = arith.constant 0 : index
    %31 = vector.load %arg6[%c0_14, %c0_15] : memref<16x128xf32, #tpu.memory_space<vmem>>, vector<16x128xf32>
    tpu.vector_store %arg6[%c0_14, %c0_15], %30 {strides = array<i32>} : memref<16x128xf32, #tpu.memory_space<vmem>>, vector<16x128xf32>,
    return
  }
  func.func @transform_0(%arg0: i32, %arg1: i32) -> (i32, i32) {
    %c0_i32 = arith.constant 0 : i32
    %c0_i32_0 = arith.constant 0 : i32
    return %c0_i32, %arg1 : i32, i32
  }
  func.func @transform_1(%arg0: i32, %arg1: i32) -> (i32, i32) {
    %c0_i32 = arith.constant 0 : i32
    return %arg1, %arg0 : i32, i32
  }
  func.func @transform_2(%arg0: i32, %arg1: i32) -> (i32, i32) {
    %c0_i32 = arith.constant 0 : i32
    %c0_i32_0 = arith.constant 0 : i32
    return %c0_i32, %arg0 : i32, i32
  }
  func.func @transform_3(%arg0: i32, %arg1: i32) -> (i32, i32) {
    %c0_i32 = arith.constant 0 : i32
    %c0_i32_0 = arith.constant 0 : i32
    return %c0_i32, %arg0 : i32, i32
  }
  func.func @transform_4(%arg0: i32, %arg1: i32) -> (i32, i32) {
    %c0_i32 = arith.constant 0 : i32
    %c0_i32_0 = arith.constant 0 : i32
    return %c0_i32, %arg0 : i32, i32
  }
}

</mosaic_0001>

<llo_original>
// kernel: tpu_custom_call.1
$region0: #{tpu_custom_call.1}
  #allocation0 [shape = 'u32[]', space=smem, size = 0x4, offset = 0x4, fixed_abs, tag = 'smem constant byte address 0x4 - core index']
  #allocation1 [shape = 'u32[144,128]{1,0:T(1,128)}', space=vmem, size = 0x12000, scoped, tag = 'internal scratch']
  %s0 = inlined_call_operand.hbm [shape: f32[16,256], index: 0, kind: input, shape index: {}]
  %s1 = inlined_call_operand.hbm [shape: bf16[256,256], index: 1, kind: input, shape index: {}]
  %s2 = inlined_call_operand.vmem [shape: f32[1,256], index: 2, kind: input, shape index: {}]
  %s3 = inlined_call_operand.vmem [shape: f32[1,256], index: 3, kind: input, shape index: {}]
  %s4 = inlined_call_operand.hbm [shape: f32[16,256], index: 4, kind: output, shape index: {}]
  %s5 = sld [smem:[#allocation0]]
  $region57: #{tpu_custom_call.1} parent=0
    _
  %s7 = ssub.s32 1, %s5
  %s8 = scalar_select 0, %s7, %s5
  $region1: #{tpu_custom_call.1} parent=0
    #allocation2 [shape = 'u8[16384]{0}', space=vmem, size = 0x4000, scoped, tag = 'input window, operand 0, single buffered']
    #allocation3 [shape = 's32[2]{0}', space=sflag, size = 0x8, scoped, tag = 'scoped memory for tpu_custom_call.1']
    #allocation4 [shape = 's32[2]{0}', space=sflag, size = 0x8, scoped, tag = 'scoped memory for tpu_custom_call.1']
    #allocation5 [shape = 'u8[131072]{0}', space=vmem, size = 0x20000, scoped, tag = 'input window, operand 1']
    #allocation6 [shape = 's32[2]{0}', space=sflag, size = 0x8, scoped, tag = 'scoped memory for tpu_custom_call.1']
    #allocation7 [shape = 'u8[16384]{0}', space=vmem, size = 0x4000, scoped, tag = 'output window, operand 0']
    %9 = vsyncpa [#allocation3], 0
    %10 = vsyncpa [#allocation6], 0
    %s11 = scalar_lea.sflag [#allocation6], 1
    %12 = vsyncpa %s11, 0
    %13 = vsyncpa [#allocation4], 0
    %s14 = scalar_lea.sflag [#allocation4], 1
    %15 = vsyncpa %s14, 0
    loop: start=0, step=1, limit=4
    $region2: #{tpu_custom_call.1} parent=1 // loop_pre_header
      _
    $region3: #{tpu_custom_call.1} parent=1 // loop_header
      %s17 = sphi 0, %s21
      %p18 = scmp.ge.s32.totalorder %s17, 4
      %s24 = sphi 0, %s36
      %s25 = sphi 0, %s32
      %s26 = sphi 0, %s24
      %s27 = sphi 0, %s25
      %s28 = sphi 0, %s26
      %s29 = sphi 0, %s27
      %s39 = sphi 0, %s41
      %s42 = sphi 0, %s39
      %s43 = sphi 0, %s42
      %s59 = sphi 0, %s43
      %s67 = sphi 0, %s69
      %s70 = sphi 0, %s67
      %s71 = sphi 0, %s70
      %s87 = sphi 0, %s71
      %s93 = sphi 0, %s95
      %s96 = sphi 0, %s93
      %s97 = sphi 0, %s96
      %s113 = sphi 0, %s97
      %s119 = sphi 0, %s121
      %s122 = sphi 0, %s119
      %s123 = sphi 0, %s122
      %s139 = sphi 0, %s123
      %s145 = sphi 0, %s147
      %s148 = sphi 0, %s145
      %s149 = sphi 0, %s148
      %s165 = sphi 0, %s149
    $region4: #{tpu_custom_call.1} parent=1 // loop_header_branch
      %20 = sbr.rel (%p18) target = $region8
    $region5: #{tpu_custom_call.1} parent=1 // loop_body
      %s22 = ssub.s32 %s17, 1
      %s23 = ssub.s32 %s17, 2
      %s30 = sadd.s32 1, %s25
      %p31 = scmp.ge.s32.totalorder %s30, 1
      %s32 = scalar_select %p31, 0, %s30
      %s33 = sadd.s32 1, %s24
      %s34 = scalar_select %p31, %s33, %s24
      %p35 = scmp.ge.s32.totalorder %s34, 2
      %s36 = scalar_select %p35, 0, %s34
      %s37 = ssub.s32 %s25, %s32
      %p38 = scmp.eq.s32.totalorder %s37, 0
      %s40 = sadd.s32 %s39, 1
      %s41 = scalar_select %p38, %s39, %s40
      %p44 = pneg %p38
      %p45 = scmp.eq.s32.totalorder %s17, 1
      %p46 = por %p44, %p45
      %p47 = scmp.ne.s32.totalorder %s39, %s42
      %p48 = scmp.eq.s32.totalorder %s17, 0
      %p49 = por %p47, %p48
      %p50 = scmp.ne.s32.totalorder %s39, %s42
      %p51 = scmp.eq.s32.totalorder %s22, 1
      %p52 = por %p50, %p51
      %p53 = scmp.ne.s32.totalorder %s42, %s43
      %p54 = scmp.eq.s32.totalorder %s22, 0
      %p55 = por %p53, %p54
      %p56 = scmp.ne.s32.totalorder %s42, %s43
      %p57 = scmp.eq.s32.totalorder %s23, 1
      %p58 = por %p56, %p57
      %p60 = scmp.ne.s32.totalorder %s43, %s59
      %p61 = scmp.eq.s32.totalorder %s23, 0
      %p62 = por %p60, %p61
      %s63 = ssub.s32 %s25, %s32
      %s64 = ssub.s32 %s24, %s36
      %s65 = sor.u32 %s63, %s64
      %p66 = scmp.eq.s32.totalorder %s65, 0
      %s68 = sadd.s32 %s67, 1
      %s69 = scalar_select %p66, %s67, %s68
      %p72 = pneg %p66
      %p73 = scmp.eq.s32.totalorder %s17, 1
      %p74 = por %p72, %p73
      %p75 = scmp.ne.s32.totalorder %s67, %s70
      %p76 = scmp.eq.s32.totalorder %s17, 0
      %p77 = por %p75, %p76
      %p78 = scmp.ne.s32.totalorder %s67, %s70
      %p79 = scmp.eq.s32.totalorder %s22, 1
      %p80 = por %p78, %p79
      %p81 = scmp.ne.s32.totalorder %s70, %s71
      %p82 = scmp.eq.s32.totalorder %s22, 0
      %p83 = por %p81, %p82
      %p84 = scmp.ne.s32.totalorder %s70, %s71
      %p85 = scmp.eq.s32.totalorder %s23, 1
      %p86 = por %p84, %p85
      %p88 = scmp.ne.s32.totalorder %s71, %s87
      %p89 = scmp.eq.s32.totalorder %s23, 0
      %p90 = por %p88, %p89
      %s91 = ssub.s32 %s24, %s36
      %p92 = scmp.eq.s32.totalorder %s91, 0
      %s94 = sadd.s32 %s93, 1
      %s95 = scalar_select %p92, %s93, %s94
      %p98 = pneg %p92
      %p99 = scmp.eq.s32.totalorder %s17, 1
      %p100 = por %p98, %p99
      %p101 = scmp.ne.s32.totalorder %s93, %s96
      %p102 = scmp.eq.s32.totalorder %s17, 0
      %p103 = por %p101, %p102
      %p104 = scmp.ne.s32.totalorder %s93, %s96
      %p105 = scmp.eq.s32.totalorder %s22, 1
      %p106 = por %p104, %p105
      %p107 = scmp.ne.s32.totalorder %s96, %s97
      %p108 = scmp.eq.s32.totalorder %s22, 0
      %p109 = por %p107, %p108
      %p110 = scmp.ne.s32.totalorder %s96, %s97
      %p111 = scmp.eq.s32.totalorder %s23, 1
      %p112 = por %p110, %p111
      %p114 = scmp.ne.s32.totalorder %s97, %s113
      %p115 = scmp.eq.s32.totalorder %s23, 0
      %p116 = por %p114, %p115
      %s117 = ssub.s32 %s24, %s36
      %p118 = scmp.eq.s32.totalorder %s117, 0
      %s120 = sadd.s32 %s119, 1
      %s121 = scalar_select %p118, %s119, %s120
      %p124 = pneg %p118
      %p125 = scmp.eq.s32.totalorder %s17, 1
      %p126 = por %p124, %p125
      %p127 = scmp.ne.s32.totalorder %s119, %s122
      %p128 = scmp.eq.s32.totalorder %s17, 0
      %p129 = por %p127, %p128
      %p130 = scmp.ne.s32.totalorder %s119, %s122
      %p131 = scmp.eq.s32.totalorder %s22, 1
      %p132 = por %p130, %p131
      %p133 = scmp.ne.s32.totalorder %s122, %s123
      %p134 = scmp.eq.s32.totalorder %s22, 0
      %p135 = por %p133, %p134
      %p136 = scmp.ne.s32.totalorder %s122, %s123
      %p137 = scmp.eq.s32.totalorder %s23, 1
      %p138 = por %p136, %p137
      %p140 = scmp.ne.s32.totalorder %s123, %s139
      %p141 = scmp.eq.s32.totalorder %s23, 0
      %p142 = por %p140, %p141
      %s143 = ssub.s32 %s24, %s36
      %p144 = scmp.eq.s32.totalorder %s143, 0
      %s146 = sadd.s32 %s145, 1
      %s147 = scalar_select %p144, %s145, %s146
      %p150 = pneg %p144
      %p151 = scmp.eq.s32.totalorder %s17, 1
      %p152 = por %p150, %p151
      %p153 = scmp.ne.s32.totalorder %s145, %s148
      %p154 = scmp.eq.s32.totalorder %s17, 0
      %p155 = por %p153, %p154
      %p156 = scmp.ne.s32.totalorder %s145, %s148
      %p157 = scmp.eq.s32.totalorder %s22, 1
      %p158 = por %p156, %p157
      %p159 = scmp.ne.s32.totalorder %s148, %s149
      %p160 = scmp.eq.s32.totalorder %s22, 0
      %p161 = por %p159, %p160
      %p162 = scmp.ne.s32.totalorder %s148, %s149
      %p163 = scmp.eq.s32.totalorder %s23, 1
      %p164 = por %p162, %p163
      %p166 = scmp.ne.s32.totalorder %s149, %s165
      %p167 = scmp.eq.s32.totalorder %s23, 0
      %p168 = por %p166, %p167
      %p169 = scmp.le.s32.totalorder 1, %s17
      %p170 = scmp.lt.s32.totalorder %s17, 3
      %p171 = pnand %p169, %p170
      %p172 = pneg %p171
      // Predicated region
      $region9: #{tpu_custom_call.1} parent=5 // pred_check
        _
      $region10: #{tpu_custom_call.1} parent=5 // pred_check_branch
        %174 = sbr.rel (%p171) target = $region12
      $region11: #{tpu_custom_call.1} parent=5 // pred_region
        %s175 = ssub.s32 %s17, 1
        // Predicated region
        $region13: #{tpu_custom_call.1} parent=11 // pred_check
          %p176 = pneg %p55
        $region14: #{tpu_custom_call.1} parent=11 // pred_check_branch
          %178 = sbr.rel (%p176) target = $region16
        $region15: #{tpu_custom_call.1} parent=11 // pred_region
          %s179 = smul.u32 2, %s27
          %s181 = ssub.s32 512, 512
          %182 = vsyncadd [#allocation3], %s181
          %s183 = smul.addr %s179, 128
          %s184 = scalar_lea.hbm %s0, %s183
          %s185 = sshll.u32 [#allocation2], 4
          %s186 = int_to_ptr.vmem [resolvable:$true] %s185
          %191 = dma.hbm_to_vmem [thread:$0]  %s184, 512, %s186, [#allocation3], 256, 256, 16
        $region16: #{tpu_custom_call.1} parent=11 // pred_fallthru
          _
      $region12: #{tpu_custom_call.1} parent=5 // pred_fallthru
        _
      %p192 = scmp.lt.s32.totalorder %s17, 2
      // Predicated region
      $region17: #{tpu_custom_call.1} parent=5 // pred_check
        %p193 = pneg %p192
      $region18: #{tpu_custom_call.1} parent=5 // pred_check_branch
        %195 = sbr.rel (%p193) target = $region20
      $region19: #{tpu_custom_call.1} parent=5 // pred_region
        // Predicated region
        $region21: #{tpu_custom_call.1} parent=19 // pred_check
          %p196 = pneg %p77
        $region22: #{tpu_custom_call.1} parent=19 // pred_check_branch
          %198 = sbr.rel (%p196) target = $region24
        $region23: #{tpu_custom_call.1} parent=19 // pred_region
          %s199 = sand.u32 %s67, 1
          %s200 = scalar_lea.sflag [#allocation6], %s199
          %s201 = sand.u32 %s67, 1
          %s202 = smul.addr %s201, 128
          %s203 = scalar_lea.vmem [#allocation5], %s202
          %s204 = smul.u32 32, %s25
          %s206 = ssub.s32 2048, 2048
          %207 = vsyncadd %s200, %s206
          %s208 = smul.addr %s204, 2
          %s209 = sadd.s32 %s24, %s208
          %s210 = smul.addr %s209, 64
          %s211 = scalar_lea.hbm %s1, %s210
          %s212 = sshll.u32 %s203, 4
          %s213 = int_to_ptr.vmem [resolvable:$true] %s212
          %218 = dma.hbm_to_vmem [thread:$0]  %s211, 2048, %s213, %s200, 128, 64, 4
        $region24: #{tpu_custom_call.1} parent=19 // pred_fallthru
          _
        // Predicated region
        $region25: #{tpu_custom_call.1} parent=19 // pred_check
          %p219 = pneg %p103
        $region26: #{tpu_custom_call.1} parent=19 // pred_check_branch
          %221 = sbr.rel (%p219) target = $region28
        $region27: #{tpu_custom_call.1} parent=19 // pred_region
          %p222 = scmp.lt.s32.totalorder %s24, 1
          %s223 = scalar_select %p222, %s24, 1
          %s224 = scalar_lea.vmem %s2, %s223
        $region28: #{tpu_custom_call.1} parent=19 // pred_fallthru
          _
        // Predicated region
        $region29: #{tpu_custom_call.1} parent=19 // pred_check
          %p225 = pneg %p129
        $region30: #{tpu_custom_call.1} parent=19 // pred_check_branch
          %227 = sbr.rel (%p225) target = $region32
        $region31: #{tpu_custom_call.1} parent=19 // pred_region
          %p228 = scmp.lt.s32.totalorder %s24, 1
          %s229 = scalar_select %p228, %s24, 1
          %s230 = scalar_lea.vmem %s3, %s229
        $region32: #{tpu_custom_call.1} parent=19 // pred_fallthru
          _
      $region20: #{tpu_custom_call.1} parent=5 // pred_fallthru
        _
      %p231 = scmp.le.s32.totalorder 1, %s17
      %p232 = scmp.lt.s32.totalorder %s17, 3
      %p233 = pnand %p231, %p232
      %p234 = pneg %p233
      // Predicated region
      $region33: #{tpu_custom_call.1} parent=5 // pred_check
        _
      $region34: #{tpu_custom_call.1} parent=5 // pred_check_branch
        %236 = sbr.rel (%p233) target = $region36
      $region35: #{tpu_custom_call.1} parent=5 // pred_region
        %s237 = ssub.s32 %s17, 1
        // Predicated region
        $region37: #{tpu_custom_call.1} parent=35 // pred_check
          %p238 = pneg %p55
        $region38: #{tpu_custom_call.1} parent=35 // pred_check_branch
          %240 = sbr.rel (%p238) target = $region40
        $region39: #{tpu_custom_call.1} parent=35 // pred_region
          %241 = dma.done [#allocation3], 512
        $region40: #{tpu_custom_call.1} parent=35 // pred_fallthru
          _
        %s242 = sand.u32 %s70, 1
        %s243 = scalar_lea.sflag [#allocation6], %s242
        %s244 = sand.u32 %s70, 1
        %s245 = smul.addr %s244, 128
        %s246 = scalar_lea.vmem [#allocation5], %s245
        // Predicated region
        $region41: #{tpu_custom_call.1} parent=35 // pred_check
          %p247 = pneg %p83
        $region42: #{tpu_custom_call.1} parent=35 // pred_check_branch
          %249 = sbr.rel (%p247) target = $region44
        $region43: #{tpu_custom_call.1} parent=35 // pred_region
          %250 = dma.done %s243, 2048
        $region44: #{tpu_custom_call.1} parent=35 // pred_fallthru
          _
        %p251 = pneg %p55
        %p252 = pneg %p52
        %s253 = sand.u32 %s70, 1
        %s254 = scalar_lea.sflag [#allocation6], %s253
        %s255 = sand.u32 %s70, 1
        %s256 = smul.addr %s255, 128
        %s257 = scalar_lea.vmem [#allocation5], %s256
        %p258 = pneg %p83
        %p259 = pneg %p80
        %p260 = scmp.lt.s32.totalorder %s26, 1
        %s261 = scalar_select %p260, %s26, 1
        %s262 = scalar_lea.vmem %s2, %s261
        %p263 = pneg %p109
        %p264 = pneg %p106
        %p265 = scmp.lt.s32.totalorder %s26, 1
        %s266 = scalar_select %p265, %s26, 1
        %s267 = scalar_lea.vmem %s3, %s266
        %p268 = pneg %p135
        %p269 = pneg %p132
        %p270 = pneg %p161
        %p271 = pneg %p158
        %s272 = sand.u32 %s148, 1
        %s273 = scalar_lea.sflag [#allocation4], %s272
        %s274 = sand.u32 %s148, 1
        %s275 = smul.addr %s274, 16
        %s276 = scalar_lea.vmem [#allocation7], %s275
        %s277 = smul.u32 2, %s27
        %s278 = smul.u32 32, %s27
        %p279 = scmp.lt.s32.totalorder %s26, 1
        %s280 = scalar_select %p279, %s26, 1
        %s281 = scalar_lea.vmem %s2, %s280
        %p282 = scmp.lt.s32.totalorder %s26, 1
        %s283 = scalar_select %p282, %s26, 1
        %s284 = scalar_lea.vmem %s3, %s283
        %v286 = vld [vmem:[#allocation2] sm:$0xff]
        %v287 = vld [vmem:[#allocation2 + $0x8] sm:$0xff]
        %v288 = vld [vmem:[#allocation2 + $0x10] sm:$0xff]
        %v289 = vld [vmem:[#allocation2 + $0x18] sm:$0xff]
        %v290 = vpack.c.bf16 %v288, %v286
        %v291 = vpack.c.bf16 %v289, %v287
        %v292 = vld [vmem:[%s246] sm:$0xf]
        %v293 = vld [vmem:[%s246 + $0x4] sm:$0xf]
        %v294 = vld [vmem:[%s246 + $0x8] sm:$0xf]
        %v295 = vld [vmem:[%s246 + $0xc] sm:$0xf]
        %v296 = vld [vmem:[%s246 + $0x10] sm:$0xf]
        %v297 = vld [vmem:[%s246 + $0x14] sm:$0xf]
        %v298 = vld [vmem:[%s246 + $0x18] sm:$0xf]
        %v299 = vld [vmem:[%s246 + $0x1c] sm:$0xf]
        %v300 = vld [vmem:[%s246 + $0x20] sm:$0xf]
        %v301 = vld [vmem:[%s246 + $0x24] sm:$0xf]
        %v302 = vld [vmem:[%s246 + $0x28] sm:$0xf]
        %v303 = vld [vmem:[%s246 + $0x2c] sm:$0xf]
        %v304 = vld [vmem:[%s246 + $0x30] sm:$0xf]
        %v305 = vld [vmem:[%s246 + $0x34] sm:$0xf]
        %v306 = vld [vmem:[%s246 + $0x38] sm:$0xf]
        %v307 = vld [vmem:[%s246 + $0x3c] sm:$0xf]
        %v308 = vld [vmem:[%s246 + $0x40] sm:$0xf]
        %v309 = vld [vmem:[%s246 + $0x44] sm:$0xf]
        %v310 = vld [vmem:[%s246 + $0x48] sm:$0xf]
        %v311 = vld [vmem:[%s246 + $0x4c] sm:$0xf]
        %v312 = vld [vmem:[%s246 + $0x50] sm:$0xf]
        %v313 = vld [vmem:[%s246 + $0x54] sm:$0xf]
        %v314 = vld [vmem:[%s246 + $0x58] sm:$0xf]
        %v315 = vld [vmem:[%s246 + $0x5c] sm:$0xf]
        %v316 = vld [vmem:[%s246 + $0x60] sm:$0xf]
        %v317 = vld [vmem:[%s246 + $0x64] sm:$0xf]
        %v318 = vld [vmem:[%s246 + $0x68] sm:$0xf]
        %v319 = vld [vmem:[%s246 + $0x6c] sm:$0xf]
        %v320 = vld [vmem:[%s246 + $0x70] sm:$0xf]
        %v321 = vld [vmem:[%s246 + $0x74] sm:$0xf]
        %v322 = vld [vmem:[%s246 + $0x78] sm:$0xf]
        %v323 = vld [vmem:[%s246 + $0x7c] sm:$0xf]
        %v356 = vunpack.c.l.b16 %v292
        %v357 = vunpack.c.l.b16 %v293
        %v358 = vunpack.c.l.b16 %v294
        %v359 = vunpack.c.l.b16 %v295
        %v360 = vunpack.c.l.b16 %v296
        %v361 = vunpack.c.l.b16 %v297
        %v362 = vunpack.c.l.b16 %v298
        %v363 = vunpack.c.l.b16 %v299
        %v364 = vunpack.c.l.b16 %v300
        %v365 = vunpack.c.l.b16 %v301
        %v366 = vunpack.c.l.b16 %v302
        %v367 = vunpack.c.l.b16 %v303
        %v368 = vunpack.c.l.b16 %v304
        %v369 = vunpack.c.l.b16 %v305
        %v370 = vunpack.c.l.b16 %v306
        %v371 = vunpack.c.l.b16 %v307
        %v372 = vunpack.c.l.b16 %v308
        %v373 = vunpack.c.l.b16 %v309
        %v374 = vunpack.c.l.b16 %v310
        %v375 = vunpack.c.l.b16 %v311
        %v376 = vunpack.c.l.b16 %v312
        %v377 = vunpack.c.l.b16 %v313
        %v378 = vunpack.c.l.b16 %v314
        %v379 = vunpack.c.l.b16 %v315
        %v380 = vunpack.c.l.b16 %v316
        %v381 = vunpack.c.l.b16 %v317
        %v382 = vunpack.c.l.b16 %v318
        %v383 = vunpack.c.l.b16 %v319
        %v384 = vunpack.c.l.b16 %v320
        %v385 = vunpack.c.l.b16 %v321
        %v386 = vunpack.c.l.b16 %v322
        %v387 = vunpack.c.l.b16 %v323
        %v388 = vpack.c.b16 %v357, %v356
        %v389 = vpack.c.b16 %v359, %v358
        %v390 = vpack.c.b16 %v361, %v360
        %v391 = vpack.c.b16 %v363, %v362
        %v392 = vpack.c.b16 %v365, %v364
        %v393 = vpack.c.b16 %v367, %v366
        %v394 = vpack.c.b16 %v369, %v368
        %v395 = vpack.c.b16 %v371, %v370
        %v396 = vpack.c.b16 %v373, %v372
        %v397 = vpack.c.b16 %v375, %v374
        %v398 = vpack.c.b16 %v377, %v376
        %v399 = vpack.c.b16 %v379, %v378
        %v400 = vpack.c.b16 %v381, %v380
        %v401 = vpack.c.b16 %v383, %v382
        %v402 = vpack.c.b16 %v385, %v384
        %v403 = vpack.c.b16 %v387, %v386
        %420 = vmatprep.subr.bf16.mxu0 0
        %421 = vmatpush1.bf16.msra.mxu0 %v395
        %422 = vmatprep.subr.bf16.mxu0 0
        %423 = vmatpush1.bf16.msra.mxu0 %v394
        %424 = vmatprep.subr.bf16.mxu0 0
        %425 = vmatpush1.bf16.msra.mxu0 %v393
        %426 = vmatprep.subr.bf16.mxu0 0
        %427 = vmatpush1.bf16.msra.mxu0 %v392
        %428 = vmatprep.subr.bf16.mxu0 0
        %429 = vmatpush1.bf16.msra.mxu0 %v391
        %430 = vmatprep.subr.bf16.mxu0 0
        %431 = vmatpush1.bf16.msra.mxu0 %v390
        %432 = vmatprep.subr.bf16.mxu0 0
        %433 = vmatpush1.bf16.msra.mxu0 %v389
        %434 = vmatprep.subr.bf16.mxu0 0
        %435 = vmatpush1.bf16.msra.mxu0 %v388
        %436 = vmatprep.subr.bf16.mxu0 0
        %437 = vmatpush2.bf16.msra.mxu0 %v403
        %438 = vmatprep.subr.bf16.mxu0 0
        %439 = vmatpush2.bf16.msra.mxu0 %v402
        %440 = vmatprep.subr.bf16.mxu0 0
        %441 = vmatpush2.bf16.msra.mxu0 %v401
        %442 = vmatprep.subr.bf16.mxu0 0
        %443 = vmatpush2.bf16.msra.mxu0 %v400
        %444 = vmatprep.subr.bf16.mxu0 0
        %445 = vmatpush2.bf16.msra.mxu0 %v399
        %446 = vmatprep.subr.bf16.mxu0 0
        %447 = vmatpush2.bf16.msra.mxu0 %v398
        %448 = vmatprep.subr.bf16.mxu0 0
        %449 = vmatpush2.bf16.msra.mxu0 %v397
        %450 = vmatprep.subr.bf16.mxu0 0
        %451 = vmatpush2.bf16.msra.mxu0 %v396
        %452 = vmatprep.mubr.bf16.mxu0 %v291
        %453 = vmatmul.mubr.bf16.gmra.mxu0 %v290
        %v454 = vpop.f32.mrf.mxu0
        %v455 = vadd.f32 0.0, %v454
        %v456 = vpop.f32.mrf.mxu0
        %v457 = vpop.f32.mrf.mxu0
        %v458 = vadd.f32 0.0, %v457
        %v459 = vpop.f32.mrf.mxu0
        %460 = vdwg.mxu0
        %v461 = vadd.f32 %v455, %v458
        %v462 = vrot.slane %v461, 4
        %v463 = vadd.f32 %v461, %v462
        %v464 = vrot.slane %v463, 2
        %v465 = vadd.f32 %v463, %v464
        %v466 = vrot.slane %v465, 1
        %v467 = vadd.f32 %v465, %v466
        %v468 = vmul.f32 %v467, 0.0625
        %v469 = vmul.f32 %v455, %v455
        %v470 = vmul.f32 %v458, %v458
        %v471 = vadd.f32 %v469, %v470
        %v472 = vrot.slane %v471, 4
        %v473 = vadd.f32 %v471, %v472
        %v474 = vrot.slane %v473, 2
        %v475 = vadd.f32 %v473, %v474
        %v476 = vrot.slane %v475, 1
        %v477 = vadd.f32 %v475, %v476
        %v478 = vmul.f32 %v477, 0.0625
        %v479 = vmul.f32 %v468, %v468
        %v480 = vsub.f32 %v478, %v479
        %v481 = vmax.f32 %v480, 0.0
        %v482 = vadd.f32 %v481, 1e-05
        %v483 = vrsqrt.pop %v482
        %v484 = vld [vmem:[%s281] sm:$0x1]
        %v485 = vmul.f32 %v483, %v484
        %v486 = vld [vmem:[%s284] sm:$0x1]
        %v487 = vmul.f32 %v468, %v485
        %v488 = vsub.f32 %v486, %v487
        %v489 = vlaneseq
        %v490 = vshrl.u32 %v489, 7
        %v491 = vsub.s32 0, %v490
        %v492 = vrot.slane %v485, %v491
        %v493 = vmul.f32 %v455, %v492
        %v494 = vmul.f32 %v458, %v492
        %v496 = vlaneseq
        %v497 = vshrl.u32 %v496, 7
        %v498 = vsub.s32 0, %v497
        %v499 = vrot.slane %v488, %v498
        %v501 = vadd.f32 %v493, %v499
        %v502 = vadd.f32 %v494, %v499
        %v503 = vmax.f32 %v501, 0.0
        %v504 = vmax.f32 %v502, 0.0
        %505 = vst [vmem:[%s276] sm:$0xff] %v503
        %506 = vst [vmem:[%s276 + $0x8] sm:$0xff] %v504
        %s507 = sand.u32 %s148, 1
        %s508 = scalar_lea.sflag [#allocation4], %s507
        %s509 = sand.u32 %s148, 1
        %s510 = smul.addr %s509, 16
        %s511 = scalar_lea.vmem [#allocation7], %s510
        // Predicated region
        $region45: #{tpu_custom_call.1} parent=35 // pred_check
          %p512 = pneg %p158
        $region46: #{tpu_custom_call.1} parent=35 // pred_check_branch
          %514 = sbr.rel (%p512) target = $region48
        $region47: #{tpu_custom_call.1} parent=35 // pred_region
          %s516 = ssub.s32 256, 256
          %517 = vsyncadd %s508, %s516
          %s518 = smul.addr %s26, 128
          %s519 = scalar_lea.hbm %s4, %s518
          %s520 = sshll.u32 %s511, 4
          %s521 = int_to_ptr.vmem [resolvable:$true] %s520
          %526 = dma.vmem_to_hbm [thread:$0]  %s521, 256, %s519, %s508, 128, 256, 8
        $region48: #{tpu_custom_call.1} parent=35 // pred_fallthru
          _
      $region36: #{tpu_custom_call.1} parent=5 // pred_fallthru
        _
      %p527 = scmp.le.s32.totalorder 2, %s17
      // Predicated region
      $region49: #{tpu_custom_call.1} parent=5 // pred_check
        %p528 = pneg %p527
      $region50: #{tpu_custom_call.1} parent=5 // pred_check_branch
        %530 = sbr.rel (%p528) target = $region52
      $region51: #{tpu_custom_call.1} parent=5 // pred_region
        %s531 = ssub.s32 %s17, 2
        // Predicated region
        $region53: #{tpu_custom_call.1} parent=51 // pred_check
          %p532 = pneg %p164
        $region54: #{tpu_custom_call.1} parent=51 // pred_check_branch
          %534 = sbr.rel (%p532) target = $region56
        $region55: #{tpu_custom_call.1} parent=51 // pred_region
          %s535 = sand.u32 %s149, 1
          %s536 = scalar_lea.sflag [#allocation4], %s535
          %s537 = sand.u32 %s149, 1
          %s538 = smul.addr %s537, 16
          %s539 = scalar_lea.vmem [#allocation7], %s538
          %540 = dma.done %s536, 256
        $region56: #{tpu_custom_call.1} parent=51 // pred_fallthru
          _
      $region52: #{tpu_custom_call.1} parent=5 // pred_fallthru
        _
    $region6: #{tpu_custom_call.1} parent=1 // loop_footer
      %s21 = sadd.s32 1, %s17
    $region7: #{tpu_custom_call.1} parent=1 // loop_footer_branch
      %16 = sbr.rel target = $region3
    $region8: #{tpu_custom_call.1} parent=1 // loop_exit
      _
    %541 = vsyncpa [#allocation3], 1
    %s542 = scalar_lea.sflag [#allocation3], 1
    %543 = vsyncpa %s542, 1
    %544 = vsyncpa [#allocation6], 1
    %s545 = scalar_lea.sflag [#allocation6], 1
    %546 = vsyncpa %s545, 1
    %547 = vsyncpa [#allocation4], 1
    %s548 = scalar_lea.sflag [#allocation4], 1
    %549 = vsyncpa %s548, 1

</llo_original>
